<compile_context>
chip_gen: v7x
topology: tpu7x:2x2x1
jax: 0.10.0
libtpu: 0.0.40
codegen_flags: <defaults>
</compile_context>

<pallas_src>
import functools

import jax
import jax.numpy as jnp
from jax.experimental import pallas as pl
from jax.experimental.pallas import tpu as pltpu

A_PAD = 128  # action head padded to one full lane group (128 lanes)


def actor_kernel(x_ref, w1_ref, b1_ref, w2_ref, b2_ref, w3_ref, b3_ref,
                 out_ref):
    # Cast activations to bf16 only at the MXU inputs; accumulate in f32.
    x = x_ref[...].astype(jnp.bfloat16)

    # fc1 + relu
    h = jnp.dot(x, w1_ref[...], preferred_element_type=jnp.float32) + b1_ref[...]
    h = jnp.maximum(h, 0.0)

    # fc2 + relu
    h = jnp.dot(h.astype(jnp.bfloat16), w2_ref[...],
                preferred_element_type=jnp.float32) + b2_ref[...]
    h = jnp.maximum(h, 0.0)

    # Action head, padded to 128 output columns.  Pad columns have zero
    # weights and a -1e30 bias, so they never win the max and exp to 0.
    logits = jnp.dot(h.astype(jnp.bfloat16), w3_ref[...],
                     preferred_element_type=jnp.float32) + b3_ref[...]

    # log_softmax over the padded (full-vreg-width) last axis.
    max_val = jnp.max(logits, axis=-1, keepdims=True)
    shifted = logits - max_val
    lse = jnp.log(jnp.sum(jnp.exp(shifted), axis=-1, keepdims=True))
    logsm = shifted - lse

    # Two 128-lane-aligned slice stores into the packed (block_b, 256) tile:
    # plain unmasked stores, no sub-vreg concatenation.
    out_ref[:, 0:A_PAD] = logits.astype(out_ref.dtype)
    out_ref[:, A_PAD:2 * A_PAD] = logsm.astype(out_ref.dtype)


def _pick_block_b(B):
    """Single grid step for small batches; for big batches, large (<=4096 row)
    tiles with at least two steps so both v7x TensorCores get work."""
    if B <= 1024:
        return B
    cand = min(4096, B // 2)
    cand = (cand // 8) * 8
    while cand >= 8 and B % cand != 0:
        cand -= 8
    return cand if cand >= 8 else B


@functools.partial(jax.jit, static_argnames=("n_actions", "block_b"))
def actor_forward(state, w1, b1, w2, b2, w3p, b3p, *, n_actions, block_b=None):
    B, D_in = state.shape
    H1 = w1.shape[1]
    H2 = w2.shape[1]
    assert w3p.shape == (H2, A_PAD) and b3p.shape == (1, A_PAD)

    if block_b is None:
        block_b = _pick_block_b(B)
    assert B % block_b == 0, "batch must be divisible by block_b"
    assert block_b == B or block_b % 8 == 0, "block_b must be 8-aligned"
    grid = (B // block_b,)

    # Advisory cost hint so XLA can schedule/overlap this small custom call.
    flops = 2 * B * (D_in * H1 + H1 * H2 + H2 * A_PAD)
    bytes_accessed = (
        state.size * state.dtype.itemsize
        + sum(a.size * a.dtype.itemsize for a in (w1, b1, w2, b2, w3p, b3p))
        + B * 2 * A_PAD * 4)
    cost = pl.CostEstimate(flops=flops,
                           transcendentals=B * (A_PAD + 1),  # exp + log / row
                           bytes_accessed=bytes_accessed)

    packed = pl.pallas_call(
        actor_kernel,
        out_shape=jax.ShapeDtypeStruct((B, 2 * A_PAD), jnp.float32),
        grid_spec=pltpu.PrefetchScalarGridSpec(
            num_scalar_prefetch=0,
            grid=grid,
            in_specs=[
                pl.BlockSpec((block_b, D_in), lambda i: (i, 0)),  # state tile
                pl.BlockSpec((D_in, H1), lambda i: (0, 0)),       # fc1 weight
                pl.BlockSpec((1, H1), lambda i: (0, 0)),          # fc1 bias
                pl.BlockSpec((H1, H2), lambda i: (0, 0)),         # fc2 weight
                pl.BlockSpec((1, H2), lambda i: (0, 0)),          # fc2 bias
                pl.BlockSpec((H2, A_PAD), lambda i: (0, 0)),      # act weight (padded)
                pl.BlockSpec((1, A_PAD), lambda i: (0, 0)),       # act bias (padded)
            ],
            out_specs=pl.BlockSpec((block_b, 2 * A_PAD), lambda i: (i, 0)),
        ),
        compiler_params=pltpu.CompilerParams(
            dimension_semantics=("parallel",),
            vmem_limit_bytes=32 * 1024 * 1024,
        ),
        cost_estimate=cost,
    )(state, w1, b1, w2, b2, w3p, b3p)

    logits = packed[:, :n_actions]
    logsm = packed[:, A_PAD:A_PAD + n_actions]
    # First-index argmax (matches torch.argmax for distinct values); for A=2
    # this is a single compare -- cheaper in the wrapper than a narrow int32
    # store from the kernel.
    amax = jnp.argmax(logits, axis=-1).astype(jnp.int32)
    return logits, amax, logsm


def init_linear(key, fan_in, fan_out):
    """PyTorch nn.Linear default init: U(-1/sqrt(fan_in), +1/sqrt(fan_in)).
    Weight returned transposed as [fan_in, fan_out] (bf16 storage halves the
    HBM->VMEM weight traffic); bias kept f32."""
    kw, kb = jax.random.split(key)
    bound = 1.0 / jnp.sqrt(fan_in)
    w = jax.random.uniform(kw, (fan_in, fan_out), jnp.float32, -bound, bound)
    b = jax.random.uniform(kb, (1, fan_out), jnp.float32, -bound, bound)
    return w.astype(jnp.bfloat16), b


def pad_action_head(w3, b3):
    """Zero-pad the action head to 128 output columns; pad-column bias is a
    large finite negative so padded logits never affect max/softmax.  Done
    once at parameter-setup time, not per forward call."""
    H2, A = w3.shape
    w3p = jnp.zeros((H2, A_PAD), w3.dtype).at[:, :A].set(w3)
    b3p = jnp.full((1, A_PAD), -1e30, jnp.float32).at[:, :A].set(b3)
    return w3p, b3p


if __name__ == "__main__":
    # Small, module-consistent shapes (fc dims = module default 256, which
    # also fills the 256-wide MXU on v6e/v7x).
    batch = 16
    input_dims = 16
    fc1_dims = fc2_dims = 256
    n_actions = 2               # module default

    key = jax.random.PRNGKey(0)
    k_state, k1, k2, k3 = jax.random.split(key, 4)

    state = jax.random.normal(k_state, (batch, input_dims), jnp.float32)
    w1, b1 = init_linear(k1, input_dims, fc1_dims)
    w2, b2 = init_linear(k2, fc2_dims, fc2_dims)
    w3, b3 = init_linear(k3, fc2_dims, n_actions)
    w3p, b3p = pad_action_head(w3, b3)

    logits, amax, logsm = actor_forward(state, w1, b1, w2, b2, w3p, b3p,
                                        n_actions=n_actions)
    jax.block_until_ready((logits, amax, logsm))

    # Reference check in plain JAX with the UNPADDED head, using the same
    # bf16-weight / f32-accumulate recipe as the kernel (the padding must be
    # numerically invisible in the first n_actions columns).
    h = jnp.maximum(
        jnp.dot(state.astype(jnp.bfloat16), w1,
                preferred_element_type=jnp.float32) + b1, 0.0)
    h = jnp.maximum(
        jnp.dot(h.astype(jnp.bfloat16), w2,
                preferred_element_type=jnp.float32) + b2, 0.0)
    ref_logits = jnp.dot(h.astype(jnp.bfloat16), w3,
                         preferred_element_type=jnp.float32) + b3
    ref_amax = jnp.argmax(ref_logits, axis=-1).astype(jnp.int32)
    ref_logsm = jax.nn.log_softmax(ref_logits, axis=-1)

    assert logits.shape == (batch, n_actions)
    assert logsm.shape == (batch, n_actions)
    assert jnp.allclose(logits, ref_logits, atol=1e-3, rtol=1e-3)
    assert jnp.array_equal(amax, ref_amax)
    assert jnp.allclose(logsm, ref_logsm, atol=1e-3, rtol=1e-3)

    # TODO(synk): sample_normal (tanh-squashed Normal sampling) is a separate
    # method, not part of forward(); not implemented here.
    print("KERNEL_OK")
</pallas_src>

<mosaic_0001>
module attributes {stable_mosaic.version = 11 : i64} {
  func.func @actor_kernel(%arg0: i32, %arg1: memref<16x16xf32, #tpu.memory_space<vmem>>, %arg2: memref<16x256xbf16, #tpu.memory_space<vmem>>, %arg3: memref<1x256xf32, #tpu.memory_space<vmem>>, %arg4: memref<256x256xbf16, #tpu.memory_space<vmem>>, %arg5: memref<1x256xf32, #tpu.memory_space<vmem>>, %arg6: memref<256x128xbf16, #tpu.memory_space<vmem>>, %arg7: memref<1x128xf32, #tpu.memory_space<vmem>>, %arg8: memref<16x256xf32, #tpu.memory_space<vmem>>) attributes {dimension_semantics = [#tpu.dimension_semantics<parallel>], iteration_bounds = array<i64: 1>, scalar_prefetch = 0 : i64, scratch_operands = 0 : i64, tpu.core_type = #tpu.core_type<tc>, window_params = [{transform_indices = @transform_0, window_bounds = array<i64: 16, 16>}, {pipeline_mode = #tpu.pipeline_mode<synchronous>, transform_indices = @transform_1, window_bounds = array<i64: 16, 256>}, {pipeline_mode = #tpu.pipeline_mode<synchronous>, transform_indices = @transform_2, window_bounds = array<i64: 1, 256>}, {pipeline_mode = #tpu.pipeline_mode<synchronous>, transform_indices = @transform_3, window_bounds = array<i64: 256, 256>}, {pipeline_mode = #tpu.pipeline_mode<synchronous>, transform_indices = @transform_4, window_bounds = array<i64: 1, 256>}, {pipeline_mode = #tpu.pipeline_mode<synchronous>, transform_indices = @transform_5, window_bounds = array<i64: 256, 128>}, {pipeline_mode = #tpu.pipeline_mode<synchronous>, transform_indices = @transform_6, window_bounds = array<i64: 1, 128>}, {transform_indices = @transform_7, window_bounds = array<i64: 16, 256>}]} {
    %c0 = arith.constant 0 : index
    %c0_0 = arith.constant 0 : index
    %0 = vector.load %arg1[%c0, %c0_0] : memref<16x16xf32, #tpu.memory_space<vmem>>, vector<16x16xf32>
    %1 = arith.truncf %0 : vector<16x16xf32> to vector<16x16xbf16>
    %c0_1 = arith.constant 0 : index
    %c0_2 = arith.constant 0 : index
    %2 = vector.load %arg2[%c0_1, %c0_2] : memref<16x256xbf16, #tpu.memory_space<vmem>>, vector<16x256xbf16>
    %cst = arith.constant dense<0.000000e+00> : vector<16x256xf32>
    %3 = tpu.matmul %1, %2, %cst {dimension_numbers = #tpu.dot_dimension_numbers<[1], [0], [0], [1], [0, 0, 1, 1], [], []>} : vector<16x16xbf16>, vector<16x256xbf16>, vector<16x256xf32> -> vector<16x256xf32>
    %c0_3 = arith.constant 0 : index
    %c0_4 = arith.constant 0 : index
    %4 = vector.load %arg3[%c0_3, %c0_4] : memref<1x256xf32, #tpu.memory_space<vmem>>, vector<1x256xf32>
    %5 = vector.broadcast %4 : vector<1x256xf32> to vector<16x256xf32>
    %6 = arith.addf %3, %5 : vector<16x256xf32>
    %cst_5 = arith.constant 0.000000e+00 : f32
    %7 = vector.broadcast %cst_5 : f32 to vector<16x256xf32>
    %8 = arith.maximumf %6, %7 : vector<16x256xf32>
    %9 = arith.truncf %8 : vector<16x256xf32> to vector<16x256xbf16>
    %c0_6 = arith.constant 0 : index
    %c0_7 = arith.constant 0 : index
    %10 = vector.load %arg4[%c0_6, %c0_7] : memref<256x256xbf16, #tpu.memory_space<vmem>>, vector<256x256xbf16>
    %cst_8 = arith.constant dense<0.000000e+00> : vector<16x256xf32>
    %11 = tpu.matmul %9, %10, %cst_8 {dimension_numbers = #tpu.dot_dimension_numbers<[1], [0], [0], [1], [0, 0, 1, 1], [], []>} : vector<16x256xbf16>, vector<256x256xbf16>, vector<16x256xf32> -> vector<16x256xf32>
    %c0_9 = arith.constant 0 : index
    %c0_10 = arith.constant 0 : index
    %12 = vector.load %arg5[%c0_9, %c0_10] : memref<1x256xf32, #tpu.memory_space<vmem>>, vector<1x256xf32>
    %13 = vector.broadcast %12 : vector<1x256xf32> to vector<16x256xf32>
    %14 = arith.addf %11, %13 : vector<16x256xf32>
    %cst_11 = arith.constant 0.000000e+00 : f32
    %15 = vector.broadcast %cst_11 : f32 to vector<16x256xf32>
    %16 = arith.maximumf %14, %15 : vector<16x256xf32>
    %17 = arith.truncf %16 : vector<16x256xf32> to vector<16x256xbf16>
    %c0_12 = arith.constant 0 : index
    %c0_13 = arith.constant 0 : index
    %18 = vector.load %arg6[%c0_12, %c0_13] : memref<256x128xbf16, #tpu.memory_space<vmem>>, vector<256x128xbf16>
    %cst_14 = arith.constant dense<0.000000e+00> : vector<16x128xf32>
    %19 = tpu.matmul %17, %18, %cst_14 {dimension_numbers = #tpu.dot_dimension_numbers<[1], [0], [0], [1], [0, 0, 1, 1], [], []>} : vector<16x256xbf16>, vector<256x128xbf16>, vector<16x128xf32> -> vector<16x128xf32>
    %c0_15 = arith.constant 0 : index
    %c0_16 = arith.constant 0 : index
    %20 = vector.load %arg7[%c0_15, %c0_16] : memref<1x128xf32, #tpu.memory_space<vmem>>, vector<1x128xf32>
    %21 = vector.broadcast %20 : vector<1x128xf32> to vector<16x128xf32>
    %22 = arith.addf %19, %21 : vector<16x128xf32>
    %cst_17 = arith.constant dense<0xFF800000> : vector<16xf32>
    %23 = vector.multi_reduction <maximumf>, %22, %cst_17 [1] : vector<16x128xf32> to vector<16xf32>
    %24 = vector.shape_cast %23 : vector<16xf32> to vector<16x1xf32>
    %25 = vector.broadcast %24 : vector<16x1xf32> to vector<16x128xf32>
    %26 = arith.subf %22, %25 : vector<16x128xf32>
    %27 = math.exp %26 : vector<16x128xf32>
    %cst_18 = arith.constant dense<0.000000e+00> : vector<16xf32>
    %28 = vector.multi_reduction <add>, %27, %cst_18 [1] : vector<16x128xf32> to vector<16xf32>
    %29 = vector.shape_cast %28 : vector<16xf32> to vector<16x1xf32>
    %30 = math.log %29 : vector<16x1xf32>
    %31 = vector.broadcast %30 : vector<16x1xf32> to vector<16x128xf32>
    %32 = arith.subf %26, %31 : vector<16x128xf32>
    %c0_19 = arith.constant 0 : index
    %c0_20 = arith.constant 0 : index
    %33 = vector.load %arg8[%c0_19, %c0_20] : memref<16x256xf32, #tpu.memory_space<vmem>>, vector<16x128xf32>
    tpu.vector_store %arg8[%c0_19, %c0_20], %22 {strides = array<i32>} : memref<16x256xf32, #tpu.memory_space<vmem>>, vector<16x128xf32>,
    %c0_21 = arith.constant 0 : index
    %c128 = arith.constant 128 : index
    %34 = vector.load %arg8[%c0_21, %c128] : memref<16x256xf32, #tpu.memory_space<vmem>>, vector<16x128xf32>
    tpu.vector_store %arg8[%c0_21, %c128], %32 {strides = array<i32>} : memref<16x256xf32, #tpu.memory_space<vmem>>, vector<16x128xf32>,
    return
  }
  func.func @transform_0(%arg0: i32) -> (i32, i32) {
    %c0_i32 = arith.constant 0 : i32
    %c0_i32_0 = arith.constant 0 : i32
    return %arg0, %c0_i32 : i32, i32
  }
  func.func @transform_1(%arg0: i32) -> (i32, i32) {
    %c0_i32 = arith.constant 0 : i32
    %c0_i32_0 = arith.constant 0 : i32
    %c0_i32_1 = arith.constant 0 : i32
    return %c0_i32, %c0_i32_0 : i32, i32
  }
  func.func @transform_2(%arg0: i32) -> (i32, i32) {
    %c0_i32 = arith.constant 0 : i32
    %c0_i32_0 = arith.constant 0 : i32
    %c0_i32_1 = arith.constant 0 : i32
    return %c0_i32, %c0_i32_0 : i32, i32
  }
  func.func @transform_3(%arg0: i32) -> (i32, i32) {
    %c0_i32 = arith.constant 0 : i32
    %c0_i32_0 = arith.constant 0 : i32
    %c0_i32_1 = arith.constant 0 : i32
    return %c0_i32, %c0_i32_0 : i32, i32
  }
  func.func @transform_4(%arg0: i32) -> (i32, i32) {
    %c0_i32 = arith.constant 0 : i32
    %c0_i32_0 = arith.constant 0 : i32
    %c0_i32_1 = arith.constant 0 : i32
    return %c0_i32, %c0_i32_0 : i32, i32
  }
  func.func @transform_5(%arg0: i32) -> (i32, i32) {
    %c0_i32 = arith.constant 0 : i32
    %c0_i32_0 = arith.constant 0 : i32
    %c0_i32_1 = arith.constant 0 : i32
    return %c0_i32, %c0_i32_0 : i32, i32
  }
  func.func @transform_6(%arg0: i32) -> (i32, i32) {
    %c0_i32 = arith.constant 0 : i32
    %c0_i32_0 = arith.constant 0 : i32
    %c0_i32_1 = arith.constant 0 : i32
    return %c0_i32, %c0_i32_0 : i32, i32
  }
  func.func @transform_7(%arg0: i32) -> (i32, i32) {
    %c0_i32 = arith.constant 0 : i32
    %c0_i32_0 = arith.constant 0 : i32
    return %arg0, %c0_i32 : i32, i32
  }
}

</mosaic_0001>

<llo_original>
// kernel: actor_forward.1
$region0: #{actor_forward.1}
  #allocation0 [shape = 'u32[]', space=smem, size = 0x4, offset = 0x4, fixed_abs, tag = 'smem constant byte address 0x4 - core index']
  #allocation1 [shape = 'u32[144,128]{1,0:T(1,128)}', space=vmem, size = 0x12000, scoped, tag = 'internal scratch']
  %s0 = inlined_call_operand.hbm [shape: f32[16,16], index: 0, kind: input, shape index: {}]
  %s1 = inlined_call_operand.hbm [shape: bf16[16,256], index: 1, kind: input, shape index: {}]
  %s2 = inlined_call_operand.vmem [shape: f32[1,256], index: 2, kind: input, shape index: {}]
  %s3 = inlined_call_operand.hbm [shape: bf16[256,256], index: 3, kind: input, shape index: {}]
  %s4 = inlined_call_operand.vmem [shape: f32[1,256], index: 4, kind: input, shape index: {}]
  %s5 = inlined_call_operand.hbm [shape: bf16[256,128], index: 5, kind: input, shape index: {}]
  %s6 = inlined_call_operand.vmem [shape: f32[1,128], index: 6, kind: input, shape index: {}]
  %s7 = inlined_call_operand.vmem [shape: f32[16,256], index: 7, kind: output, shape index: {}]
  %s8 = sld [smem:[#allocation0]]
  $region54: #{actor_forward.1} parent=0
    _
  %s10 = ssub.s32 1, %s8
  %s11 = scalar_select 0, %s10, %s8
  $region1: #{actor_forward.1} parent=0
    #allocation2 [shape = 'u8[8192]{0}', space=vmem, size = 0x2000, scoped, tag = 'input window, operand 0, single buffered']
    #allocation3 [shape = 's32[1]{0}', space=sflag, size = 0x4, scoped, tag = 'scoped memory for actor_forward.1']
    #allocation4 [shape = 'u8[8192]{0}', space=vmem, size = 0x2000, scoped, tag = 'input window, operand 1, single buffered']
    #allocation5 [shape = 's32[1]{0}', space=sflag, size = 0x4, scoped, tag = 'scoped memory for actor_forward.1']
    #allocation6 [shape = 'u8[131072]{0}', space=vmem, size = 0x20000, scoped, tag = 'input window, operand 3, single buffered']
    #allocation7 [shape = 'u8[65536]{0}', space=vmem, size = 0x10000, scoped, tag = 'input window, operand 5, single buffered']
    #allocation8 [shape = 's32[1]{0}', space=sflag, size = 0x4, scoped, tag = 'scoped memory for actor_forward.1']
    %12 = vsyncpa [#allocation3], 0
    %13 = vsyncpa [#allocation5], 0
    %14 = vsyncpa [#allocation8], 0
    // Predicated region
    $region2: #{actor_forward.1} parent=1 // pred_check
      _
    $region3: #{actor_forward.1} parent=1 // pred_check_branch
      %16 = sbr.rel (0) target = $region5
    $region4: #{actor_forward.1} parent=1 // pred_region
      %s18 = ssub.s32 256, 256
      %19 = vsyncadd [#allocation3], %s18
      %s20 = sshll.u32 [#allocation2], 4
      %s21 = int_to_ptr.vmem [resolvable:$true] %s20
      %26 = dma.hbm_to_vmem [thread:$0]  %s0, 256, %s21, [#allocation3], 128, 128, 8
    $region5: #{actor_forward.1} parent=1 // pred_fallthru
      _
    // Predicated region
    $region6: #{actor_forward.1} parent=1 // pred_check
      _
    $region7: #{actor_forward.1} parent=1 // pred_check_branch
      %28 = sbr.rel (0) target = $region9
    $region8: #{actor_forward.1} parent=1 // pred_region
      %s30 = ssub.s32 256, 256
      %31 = vsyncadd [#allocation5], %s30
      %s32 = sshll.u32 [#allocation4], 4
      %s33 = int_to_ptr.vmem [resolvable:$true] %s32
      %38 = dma.hbm_to_vmem [thread:$0]  %s1, 256, %s33, [#allocation5], 128, 128, 8
    $region9: #{actor_forward.1} parent=1 // pred_fallthru
      _
    // Predicated region
    $region10: #{actor_forward.1} parent=1 // pred_check
      _
    $region11: #{actor_forward.1} parent=1 // pred_check_branch
      %40 = sbr.rel (0) target = $region13
    $region12: #{actor_forward.1} parent=1 // pred_region
      _
    $region13: #{actor_forward.1} parent=1 // pred_fallthru
      _
    // Predicated region
    $region14: #{actor_forward.1} parent=1 // pred_check
      _
    $region15: #{actor_forward.1} parent=1 // pred_check_branch
      %42 = sbr.rel (0) target = $region17
    $region16: #{actor_forward.1} parent=1 // pred_region
      %s44 = ssub.s32 4096, 4096
      %45 = vsyncadd [#allocation5], %s44
      %s46 = sshll.u32 [#allocation6], 4
      %s47 = int_to_ptr.vmem [resolvable:$true] %s46
      %52 = dma.hbm_to_vmem [thread:$0]  %s3, 4096, %s47, [#allocation5], 128, 128, 8
    $region17: #{actor_forward.1} parent=1 // pred_fallthru
      _
    // Predicated region
    $region18: #{actor_forward.1} parent=1 // pred_check
      _
    $region19: #{actor_forward.1} parent=1 // pred_check_branch
      %54 = sbr.rel (0) target = $region21
    $region20: #{actor_forward.1} parent=1 // pred_region
      _
    $region21: #{actor_forward.1} parent=1 // pred_fallthru
      _
    // Predicated region
    $region22: #{actor_forward.1} parent=1 // pred_check
      _
    $region23: #{actor_forward.1} parent=1 // pred_check_branch
      %56 = sbr.rel (0) target = $region25
    $region24: #{actor_forward.1} parent=1 // pred_region
      %s58 = ssub.s32 2048, 2048
      %59 = vsyncadd [#allocation8], %s58
      %s60 = sshll.u32 [#allocation7], 4
      %s61 = int_to_ptr.vmem [resolvable:$true] %s60
      %66 = dma.hbm_to_vmem [thread:$0]  %s5, 2048, %s61, [#allocation8], 64, 64, 4
    $region25: #{actor_forward.1} parent=1 // pred_fallthru
      _
    // Predicated region
    $region26: #{actor_forward.1} parent=1 // pred_check
      _
    $region27: #{actor_forward.1} parent=1 // pred_check_branch
      %68 = sbr.rel (0) target = $region29
    $region28: #{actor_forward.1} parent=1 // pred_region
      _
    $region29: #{actor_forward.1} parent=1 // pred_fallthru
      _
    // Predicated region
    $region30: #{actor_forward.1} parent=1 // pred_check
      _
    $region31: #{actor_forward.1} parent=1 // pred_check_branch
      %70 = sbr.rel (0) target = $region33
    $region32: #{actor_forward.1} parent=1 // pred_region
      %71 = dma.done [#allocation3], 256
    $region33: #{actor_forward.1} parent=1 // pred_fallthru
      _
    // Predicated region
    $region34: #{actor_forward.1} parent=1 // pred_check
      _
    $region35: #{actor_forward.1} parent=1 // pred_check_branch
      %73 = sbr.rel (0) target = $region37
    $region36: #{actor_forward.1} parent=1 // pred_region
      %74 = dma.done [#allocation5], 256
    $region37: #{actor_forward.1} parent=1 // pred_fallthru
      _
    // Predicated region
    $region38: #{actor_forward.1} parent=1 // pred_check
      _
    $region39: #{actor_forward.1} parent=1 // pred_check_branch
      %76 = sbr.rel (0) target = $region41
    $region40: #{actor_forward.1} parent=1 // pred_region
      %77 = dma.done [#allocation5], 4096
    $region41: #{actor_forward.1} parent=1 // pred_fallthru
      _
    // Predicated region
    $region42: #{actor_forward.1} parent=1 // pred_check
      _
    $region43: #{actor_forward.1} parent=1 // pred_check_branch
      %79 = sbr.rel (0) target = $region45
    $region44: #{actor_forward.1} parent=1 // pred_region
      %80 = dma.done [#allocation8], 2048
    $region45: #{actor_forward.1} parent=1 // pred_fallthru
      _
    %v82 = vld [vmem:[#allocation2] sm:$0xff]
    %v83 = vld [vmem:[#allocation2 + $0x8] sm:$0xff]
    %v84 = vpack.c.bf16 %v83, %v82
    %v85 = vld [vmem:[#allocation4] sm:$0xff]
    %v86 = vld [vmem:[#allocation4 + $0x8] sm:$0xff]
    %v87 = vld [vmem:[%s2] sm:$0x3]
    %v89 = vlaneseq
    %v90 = vshrl.u32 %v89, 7
    %v91 = vsub.s32 0, %v90
    %v92 = vrot.slane %v87, %v91
    %v93 = vlaneseq
    %v94 = vshrl.u32 %v93, 7
    %v95 = vsub.s32 1, %v94
    %v96 = vrot.slane %v87, %v95
    %v101 = vunpack.c.l.b16 %v85
    %v102 = vunpack.c.h.b16 %v85
    %v103 = vunpack.c.l.b16 %v86
    %v104 = vunpack.c.h.b16 %v86
    %v105 = vpack.c.b16 %v103, %v101
    %v106 = vpack.c.b16 %v104, %v102
    %vm109 = vcmask 130048
    %v111 = vsel %vm109, %v84, 0
    %113 = vmatprep.subr.bf16.mxu0 %v106
    %114 = vmatpush1.bf16.msra.mxu0 %v105
    %115 = vmatprep.subr.bf16.mxu0 0
    %116 = vmatpush1.bf16.msra.mxu0 0
    %117 = vmatprep.subr.bf16.mxu0 0
    %118 = vmatpush1.bf16.msra.mxu0 0
    %119 = vmatprep.subr.bf16.mxu0 0
    %120 = vmatpush1.bf16.msra.mxu0 0
    %121 = vmatprep.subr.bf16.mxu0 0
    %122 = vmatpush1.bf16.msra.mxu0 0
    %123 = vmatprep.subr.bf16.mxu0 0
    %124 = vmatpush1.bf16.msra.mxu0 0
    %125 = vmatprep.subr.bf16.mxu0 0
    %126 = vmatpush1.bf16.msra.mxu0 0
    %127 = vmatprep.subr.bf16.mxu0 0
    %128 = vmatpush1.bf16.msra.mxu0 0
    %129 = vmatprep.subr.bf16.mxu0 0
    %130 = vmatpush1.bf16.msra.mxu0 0
    %131 = vmatprep.subr.bf16.mxu0 0
    %132 = vmatpush1.bf16.msra.mxu0 0
    %133 = vmatprep.subr.bf16.mxu0 0
    %134 = vmatpush1.bf16.msra.mxu0 0
    %135 = vmatprep.subr.bf16.mxu0 0
    %136 = vmatpush1.bf16.msra.mxu0 0
    %137 = vmatprep.subr.bf16.mxu0 0
    %138 = vmatpush1.bf16.msra.mxu0 0
    %139 = vmatprep.subr.bf16.mxu0 0
    %140 = vmatpush1.bf16.msra.mxu0 0
    %141 = vmatprep.subr.bf16.mxu0 0
    %142 = vmatpush1.bf16.msra.mxu0 0
    %143 = vmatprep.subr.bf16.mxu0 0
    %144 = vmatpush1.bf16.msra.mxu0 0
    %145 = vmatprep.mubr.bf16.mxu0 0
    %146 = vmatmul.mubr.bf16.gmra.mrb[0].mxu0 %v111
    %v147 = vpop.f32.mrb[0].mxu0
    %v148 = vadd.f32 %v92, %v147
    %v149 = vpop.f32.mrb[0].mxu0
    %v150 = vadd.f32 %v96, %v149
    %v151 = vpop.f32.mrb[0].mxu0
    %v152 = vadd.f32 %v92, %v151
    %v153 = vpop.f32.mrb[0].mxu0
    %v154 = vadd.f32 %v96, %v153
    %155 = vdwg.mxu0
    %v156 = vmax.f32 %v148, 0.0
    %v157 = vmax.f32 %v150, 0.0
    %v158 = vmax.f32 %v152, 0.0
    %v159 = vmax.f32 %v154, 0.0
    %v160 = vpack.c.bf16 %v158, %v156
    %v161 = vpack.c.bf16 %v159, %v157
    %v162 = vld [vmem:[#allocation6] sm:$0xff]
    %v163 = vld [vmem:[#allocation6 + $0x8] sm:$0xff]
    %v164 = vld [vmem:[#allocation6 + $0x10] sm:$0xff]
    %v165 = vld [vmem:[#allocation6 + $0x18] sm:$0xff]
    %v166 = vld [vmem:[#allocation6 + $0x20] sm:$0xff]
    %v167 = vld [vmem:[#allocation6 + $0x28] sm:$0xff]
    %v168 = vld [vmem:[#allocation6 + $0x30] sm:$0xff]
    %v169 = vld [vmem:[#allocation6 + $0x38] sm:$0xff]
    %v170 = vld [vmem:[#allocation6 + $0x40] sm:$0xff]
    %v171 = vld [vmem:[#allocation6 + $0x48] sm:$0xff]
    %v172 = vld [vmem:[#allocation6 + $0x50] sm:$0xff]
    %v173 = vld [vmem:[#allocation6 + $0x58] sm:$0xff]
    %v174 = vld [vmem:[#allocation6 + $0x60] sm:$0xff]
    %v175 = vld [vmem:[#allocation6 + $0x68] sm:$0xff]
    %v176 = vld [vmem:[#allocation6 + $0x70] sm:$0xff]
    %v177 = vld [vmem:[#allocation6 + $0x78] sm:$0xff]
    %v178 = vld [vmem:[#allocation6 + $0x80] sm:$0xff]
    %v179 = vld [vmem:[#allocation6 + $0x88] sm:$0xff]
    %v180 = vld [vmem:[#allocation6 + $0x90] sm:$0xff]
    %v181 = vld [vmem:[#allocation6 + $0x98] sm:$0xff]
    %v182 = vld [vmem:[#allocation6 + $0xa0] sm:$0xff]
    %v183 = vld [vmem:[#allocation6 + $0xa8] sm:$0xff]
    %v184 = vld [vmem:[#allocation6 + $0xb0] sm:$0xff]
    %v185 = vld [vmem:[#allocation6 + $0xb8] sm:$0xff]
    %v186 = vld [vmem:[#allocation6 + $0xc0] sm:$0xff]
    %v187 = vld [vmem:[#allocation6 + $0xc8] sm:$0xff]
    %v188 = vld [vmem:[#allocation6 + $0xd0] sm:$0xff]
    %v189 = vld [vmem:[#allocation6 + $0xd8] sm:$0xff]
    %v190 = vld [vmem:[#allocation6 + $0xe0] sm:$0xff]
    %v191 = vld [vmem:[#allocation6 + $0xe8] sm:$0xff]
    %v192 = vld [vmem:[#allocation6 + $0xf0] sm:$0xff]
    %v193 = vld [vmem:[#allocation6 + $0xf8] sm:$0xff]
    %v194 = vld [vmem:[%s4] sm:$0x3]
    %v196 = vlaneseq
    %v197 = vshrl.u32 %v196, 7
    %v198 = vsub.s32 0, %v197
    %v199 = vrot.slane %v194, %v198
    %v200 = vlaneseq
    %v201 = vshrl.u32 %v200, 7
    %v202 = vsub.s32 1, %v201
    %v203 = vrot.slane %v194, %v202
    %v238 = vunpack.c.l.b16 %v162
    %v239 = vunpack.c.h.b16 %v162
    %v240 = vunpack.c.l.b16 %v163
    %v241 = vunpack.c.h.b16 %v163
    %v242 = vunpack.c.l.b16 %v164
    %v243 = vunpack.c.h.b16 %v164
    %v244 = vunpack.c.l.b16 %v165
    %v245 = vunpack.c.h.b16 %v165
    %v246 = vunpack.c.l.b16 %v166
    %v247 = vunpack.c.h.b16 %v166
    %v248 = vunpack.c.l.b16 %v167
    %v249 = vunpack.c.h.b16 %v167
    %v250 = vunpack.c.l.b16 %v168
    %v251 = vunpack.c.h.b16 %v168
    %v252 = vunpack.c.l.b16 %v169
    %v253 = vunpack.c.h.b16 %v169
    %v254 = vunpack.c.l.b16 %v170
    %v255 = vunpack.c.h.b16 %v170
    %v256 = vunpack.c.l.b16 %v171
    %v257 = vunpack.c.h.b16 %v171
    %v258 = vunpack.c.l.b16 %v172
    %v259 = vunpack.c.h.b16 %v172
    %v260 = vunpack.c.l.b16 %v173
    %v261 = vunpack.c.h.b16 %v173
    %v262 = vunpack.c.l.b16 %v174
    %v263 = vunpack.c.h.b16 %v174
    %v264 = vunpack.c.l.b16 %v175
    %v265 = vunpack.c.h.b16 %v175
    %v266 = vunpack.c.l.b16 %v176
    %v267 = vunpack.c.h.b16 %v176
    %v268 = vunpack.c.l.b16 %v177
    %v269 = vunpack.c.h.b16 %v177
    %v270 = vunpack.c.l.b16 %v178
    %v271 = vunpack.c.h.b16 %v178
    %v272 = vunpack.c.l.b16 %v179
    %v273 = vunpack.c.h.b16 %v179
    %v274 = vunpack.c.l.b16 %v180
    %v275 = vunpack.c.h.b16 %v180
    %v276 = vunpack.c.l.b16 %v181
    %v277 = vunpack.c.h.b16 %v181
    %v278 = vunpack.c.l.b16 %v182
    %v279 = vunpack.c.h.b16 %v182
    %v280 = vunpack.c.l.b16 %v183
    %v281 = vunpack.c.h.b16 %v183
    %v282 = vunpack.c.l.b16 %v184
    %v283 = vunpack.c.h.b16 %v184
    %v284 = vunpack.c.l.b16 %v185
    %v285 = vunpack.c.h.b16 %v185
    %v286 = vunpack.c.l.b16 %v186
    %v287 = vunpack.c.h.b16 %v186
    %v288 = vunpack.c.l.b16 %v187
    %v289 = vunpack.c.h.b16 %v187
    %v290 = vunpack.c.l.b16 %v188
    %v291 = vunpack.c.h.b16 %v188
    %v292 = vunpack.c.l.b16 %v189
    %v293 = vunpack.c.h.b16 %v189
    %v294 = vunpack.c.l.b16 %v190
    %v295 = vunpack.c.h.b16 %v190
    %v296 = vunpack.c.l.b16 %v191
    %v297 = vunpack.c.h.b16 %v191
    %v298 = vunpack.c.l.b16 %v192
    %v299 = vunpack.c.h.b16 %v192
    %v300 = vunpack.c.l.b16 %v193
    %v301 = vunpack.c.h.b16 %v193
    %v302 = vpack.c.b16 %v240, %v238
    %v303 = vpack.c.b16 %v241, %v239
    %v304 = vpack.c.b16 %v244, %v242
    %v305 = vpack.c.b16 %v245, %v243
    %v306 = vpack.c.b16 %v248, %v246
    %v307 = vpack.c.b16 %v249, %v247
    %v308 = vpack.c.b16 %v252, %v250
    %v309 = vpack.c.b16 %v253, %v251
    %v310 = vpack.c.b16 %v256, %v254
    %v311 = vpack.c.b16 %v257, %v255
    %v312 = vpack.c.b16 %v260, %v258
    %v313 = vpack.c.b16 %v261, %v259
    %v314 = vpack.c.b16 %v264, %v262
    %v315 = vpack.c.b16 %v265, %v263
    %v316 = vpack.c.b16 %v268, %v266
    %v317 = vpack.c.b16 %v269, %v267
    %v318 = vpack.c.b16 %v272, %v270
    %v319 = vpack.c.b16 %v273, %v271
    %v320 = vpack.c.b16 %v276, %v274
    %v321 = vpack.c.b16 %v277, %v275
    %v322 = vpack.c.b16 %v280, %v278
    %v323 = vpack.c.b16 %v281, %v279
    %v324 = vpack.c.b16 %v284, %v282
    %v325 = vpack.c.b16 %v285, %v283
    %v326 = vpack.c.b16 %v288, %v286
    %v327 = vpack.c.b16 %v289, %v287
    %v328 = vpack.c.b16 %v292, %v290
    %v329 = vpack.c.b16 %v293, %v291
    %v330 = vpack.c.b16 %v296, %v294
    %v331 = vpack.c.b16 %v297, %v295
    %v332 = vpack.c.b16 %v300, %v298
    %v333 = vpack.c.b16 %v301, %v299
    %366 = vmatprep.subr.bf16.mxu0 %v303
    %367 = vmatpush1.bf16.msra.mxu0 %v302
    %368 = vmatprep.subr.bf16.mxu0 %v305
    %369 = vmatpush1.bf16.msra.mxu0 %v304
    %370 = vmatprep.subr.bf16.mxu0 %v307
    %371 = vmatpush1.bf16.msra.mxu0 %v306
    %372 = vmatprep.subr.bf16.mxu0 %v309
    %373 = vmatpush1.bf16.msra.mxu0 %v308
    %374 = vmatprep.subr.bf16.mxu0 %v311
    %375 = vmatpush1.bf16.msra.mxu0 %v310
    %376 = vmatprep.subr.bf16.mxu0 %v313
    %377 = vmatpush1.bf16.msra.mxu0 %v312
    %378 = vmatprep.subr.bf16.mxu0 %v315
    %379 = vmatpush1.bf16.msra.mxu0 %v314
    %380 = vmatprep.subr.bf16.mxu0 %v317
    %381 = vmatpush1.bf16.msra.mxu0 %v316
    %382 = vmatprep.subr.bf16.mxu0 %v319
    %383 = vmatpush1.bf16.msra.mxu0 %v318
    %384 = vmatprep.subr.bf16.mxu0 %v321
    %385 = vmatpush1.bf16.msra.mxu0 %v320
    %386 = vmatprep.subr.bf16.mxu0 %v323
    %387 = vmatpush1.bf16.msra.mxu0 %v322
    %388 = vmatprep.subr.bf16.mxu0 %v325
    %389 = vmatpush1.bf16.msra.mxu0 %v324
    %390 = vmatprep.subr.bf16.mxu0 %v327
    %391 = vmatpush1.bf16.msra.mxu0 %v326
    %392 = vmatprep.subr.bf16.mxu0 %v329
    %393 = vmatpush1.bf16.msra.mxu0 %v328
    %394 = vmatprep.subr.bf16.mxu0 %v331
    %395 = vmatpush1.bf16.msra.mxu0 %v330
    %396 = vmatprep.subr.bf16.mxu0 %v333
    %397 = vmatpush1.bf16.msra.mxu0 %v332
    %398 = vmatprep.mubr.bf16.mxu0 %v161
    %399 = vmatmul.mubr.bf16.gmra.mrb[0].mxu0 %v160
    %v400 = vpop.f32.mrb[0].mxu0
    %v401 = vadd.f32 %v199, %v400
    %v402 = vpop.f32.mrb[0].mxu0
    %v403 = vadd.f32 %v203, %v402
    %v404 = vpop.f32.mrb[0].mxu0
    %v405 = vadd.f32 %v199, %v404
    %v406 = vpop.f32.mrb[0].mxu0
    %v407 = vadd.f32 %v203, %v406
    %408 = vdwg.mxu0
    %v409 = vmax.f32 %v401, 0.0
    %v410 = vmax.f32 %v403, 0.0
    %v411 = vmax.f32 %v405, 0.0
    %v412 = vmax.f32 %v407, 0.0
    %v413 = vpack.c.bf16 %v411, %v409
    %v414 = vpack.c.bf16 %v412, %v410
    %v415 = vld [vmem:[#allocation7] sm:$0xf]
    %v416 = vld [vmem:[#allocation7 + $0x4] sm:$0xf]
    %v417 = vld [vmem:[#allocation7 + $0x8] sm:$0xf]
    %v418 = vld [vmem:[#allocation7 + $0xc] sm:$0xf]
    %v419 = vld [vmem:[#allocation7 + $0x10] sm:$0xf]
    %v420 = vld [vmem:[#allocation7 + $0x14] sm:$0xf]
    %v421 = vld [vmem:[#allocation7 + $0x18] sm:$0xf]
    %v422 = vld [vmem:[#allocation7 + $0x1c] sm:$0xf]
    %v423 = vld [vmem:[#allocation7 + $0x20] sm:$0xf]
    %v424 = vld [vmem:[#allocation7 + $0x24] sm:$0xf]
    %v425 = vld [vmem:[#allocation7 + $0x28] sm:$0xf]
    %v426 = vld [vmem:[#allocation7 + $0x2c] sm:$0xf]
    %v427 = vld [vmem:[#allocation7 + $0x30] sm:$0xf]
    %v428 = vld [vmem:[#allocation7 + $0x34] sm:$0xf]
    %v429 = vld [vmem:[#allocation7 + $0x38] sm:$0xf]
    %v430 = vld [vmem:[#allocation7 + $0x3c] sm:$0xf]
    %v431 = vld [vmem:[#allocation7 + $0x40] sm:$0xf]
    %v432 = vld [vmem:[#allocation7 + $0x44] sm:$0xf]
    %v433 = vld [vmem:[#allocation7 + $0x48] sm:$0xf]
    %v434 = vld [vmem:[#allocation7 + $0x4c] sm:$0xf]
    %v435 = vld [vmem:[#allocation7 + $0x50] sm:$0xf]
    %v436 = vld [vmem:[#allocation7 + $0x54] sm:$0xf]
    %v437 = vld [vmem:[#allocation7 + $0x58] sm:$0xf]
    %v438 = vld [vmem:[#allocation7 + $0x5c] sm:$0xf]
    %v439 = vld [vmem:[#allocation7 + $0x60] sm:$0xf]
    %v440 = vld [vmem:[#allocation7 + $0x64] sm:$0xf]
    %v441 = vld [vmem:[#allocation7 + $0x68] sm:$0xf]
    %v442 = vld [vmem:[#allocation7 + $0x6c] sm:$0xf]
    %v443 = vld [vmem:[#allocation7 + $0x70] sm:$0xf]
    %v444 = vld [vmem:[#allocation7 + $0x74] sm:$0xf]
    %v445 = vld [vmem:[#allocation7 + $0x78] sm:$0xf]
    %v446 = vld [vmem:[#allocation7 + $0x7c] sm:$0xf]
    %v447 = vld [vmem:[%s6] sm:$0x1]
    %v449 = vlaneseq
    %v450 = vshrl.u32 %v449, 7
    %v451 = vsub.s32 0, %v450
    %v452 = vrot.slane %v447, %v451
    %v486 = vunpack.c.l.b16 %v415
    %v487 = vunpack.c.l.b16 %v416
    %v488 = vunpack.c.l.b16 %v417
    %v489 = vunpack.c.l.b16 %v418
    %v490 = vunpack.c.l.b16 %v419
    %v491 = vunpack.c.l.b16 %v420
    %v492 = vunpack.c.l.b16 %v421
    %v493 = vunpack.c.l.b16 %v422
    %v494 = vunpack.c.l.b16 %v423
    %v495 = vunpack.c.l.b16 %v424
    %v496 = vunpack.c.l.b16 %v425
    %v497 = vunpack.c.l.b16 %v426
    %v498 = vunpack.c.l.b16 %v427
    %v499 = vunpack.c.l.b16 %v428
    %v500 = vunpack.c.l.b16 %v429
    %v501 = vunpack.c.l.b16 %v430
    %v502 = vunpack.c.l.b16 %v431
    %v503 = vunpack.c.l.b16 %v432
    %v504 = vunpack.c.l.b16 %v433
    %v505 = vunpack.c.l.b16 %v434
    %v506 = vunpack.c.l.b16 %v435
    %v507 = vunpack.c.l.b16 %v436
    %v508 = vunpack.c.l.b16 %v437
    %v509 = vunpack.c.l.b16 %v438
    %v510 = vunpack.c.l.b16 %v439
    %v511 = vunpack.c.l.b16 %v440
    %v512 = vunpack.c.l.b16 %v441
    %v513 = vunpack.c.l.b16 %v442
    %v514 = vunpack.c.l.b16 %v443
    %v515 = vunpack.c.l.b16 %v444
    %v516 = vunpack.c.l.b16 %v445
    %v517 = vunpack.c.l.b16 %v446
    %v518 = vpack.c.b16 %v487, %v486
    %v519 = vpack.c.b16 %v489, %v488
    %v520 = vpack.c.b16 %v491, %v490
    %v521 = vpack.c.b16 %v493, %v492
    %v522 = vpack.c.b16 %v495, %v494
    %v523 = vpack.c.b16 %v497, %v496
    %v524 = vpack.c.b16 %v499, %v498
    %v525 = vpack.c.b16 %v501, %v500
    %v526 = vpack.c.b16 %v503, %v502
    %v527 = vpack.c.b16 %v505, %v504
    %v528 = vpack.c.b16 %v507, %v506
    %v529 = vpack.c.b16 %v509, %v508
    %v530 = vpack.c.b16 %v511, %v510
    %v531 = vpack.c.b16 %v513, %v512
    %v532 = vpack.c.b16 %v515, %v514
    %v533 = vpack.c.b16 %v517, %v516
    %550 = vmatprep.subr.bf16.mxu0 0
    %551 = vmatpush1.bf16.msra.mxu0 %v518
    %552 = vmatprep.subr.bf16.mxu0 0
    %553 = vmatpush1.bf16.msra.mxu0 %v519
    %554 = vmatprep.subr.bf16.mxu0 0
    %555 = vmatpush1.bf16.msra.mxu0 %v520
    %556 = vmatprep.subr.bf16.mxu0 0
    %557 = vmatpush1.bf16.msra.mxu0 %v521
    %558 = vmatprep.subr.bf16.mxu0 0
    %559 = vmatpush1.bf16.msra.mxu0 %v522
    %560 = vmatprep.subr.bf16.mxu0 0
    %561 = vmatpush1.bf16.msra.mxu0 %v523
    %562 = vmatprep.subr.bf16.mxu0 0
    %563 = vmatpush1.bf16.msra.mxu0 %v524
    %564 = vmatprep.subr.bf16.mxu0 0
    %565 = vmatpush1.bf16.msra.mxu0 %v525
    %566 = vmatprep.subr.bf16.mxu0 0
    %567 = vmatpush1.bf16.msra.mxu0 %v526
    %568 = vmatprep.subr.bf16.mxu0 0
    %569 = vmatpush1.bf16.msra.mxu0 %v527
    %570 = vmatprep.subr.bf16.mxu0 0
    %571 = vmatpush1.bf16.msra.mxu0 %v528
    %572 = vmatprep.subr.bf16.mxu0 0
    %573 = vmatpush1.bf16.msra.mxu0 %v529
    %574 = vmatprep.subr.bf16.mxu0 0
    %575 = vmatpush1.bf16.msra.mxu0 %v530
    %576 = vmatprep.subr.bf16.mxu0 0
    %577 = vmatpush1.bf16.msra.mxu0 %v531
    %578 = vmatprep.subr.bf16.mxu0 0
    %579 = vmatpush1.bf16.msra.mxu0 %v532
    %580 = vmatprep.subr.bf16.mxu0 0
    %581 = vmatpush1.bf16.msra.mxu0 %v533
    %582 = vmatprep.mubr.bf16.mxu0 %v414
    %583 = vmatmul.mubr.bf16.gmra.mrb[0].mxu0 %v413
    %v584 = vpop.f32.mrb[0].mxu0
    %v585 = vadd.f32 %v452, %v584
    %v586 = vpop.f32.mrb[0].mxu0
    %v587 = vpop.f32.mrb[0].mxu0
    %v588 = vadd.f32 %v452, %v587
    %v589 = vpop.f32.mrb[0].mxu0
    %590 = vdwg.mxu0
    %591 = vmax.xlane.f32.xlu0 %v585
    %v592 = vpop.xlane.xlu0 %591
    %593 = vmax.xlane.f32.xlu0 %v588
    %v594 = vpop.xlane.xlu0 %593
    %v595 = vsub.f32 %v585, %v592
    %v596 = vsub.f32 %v588, %v594
    %v597 = vmul.f32 %v595, 1.442695
    %v598 = vpow.pop %v597
    %v599 = vmul.f32 %v596, 1.442695
    %v600 = vpow.pop %v599
    %601 = vadd.xlane.f32.xlu0 %v598
    %v602 = vpop.xlane.xlu0 %601
    %603 = vadd.xlane.f32.xlu0 %v600
    %v604 = vpop.xlane.xlu0 %603
    %v605 = vlog2.pop %v602
    %v606 = vmul.f32 %v605, 0.6931472
    %v607 = vlog2.pop %v604
    %v608 = vmul.f32 %v607, 0.6931472
    %v609 = vsub.f32 %v595, %v606
    %v610 = vsub.f32 %v596, %v608
    %611 = vst [vmem:[%s7] sm:$0xff] %v585
    %612 = vst [vmem:[%s7 + $0x10] sm:$0xff] %v588
    %613 = vst [vmem:[%s7 + $0x8] sm:$0xff] %v609
    %614 = vst [vmem:[%s7 + $0x18] sm:$0xff] %v610
    // Predicated region
    $region46: #{actor_forward.1} parent=1 // pred_check
      _
    $region47: #{actor_forward.1} parent=1 // pred_check_branch
      %616 = sbr.rel (0) target = $region49
    $region48: #{actor_forward.1} parent=1 // pred_region
      _
    $region49: #{actor_forward.1} parent=1 // pred_fallthru
      _
    // Predicated region
    $region50: #{actor_forward.1} parent=1 // pred_check
      _
    $region51: #{actor_forward.1} parent=1 // pred_check_branch
      %618 = sbr.rel (0) target = $region53
    $region52: #{actor_forward.1} parent=1 // pred_region
      _
    $region53: #{actor_forward.1} parent=1 // pred_fallthru
      _
    %619 = vsyncpa [#allocation3], 1
    %620 = vsyncpa [#allocation5], 1
    %621 = vsyncpa [#allocation8], 1

</llo_original>
